<compile_context>
chip_gen: v7x
topology: tpu7x:2x2x1
jax: 0.10.0
libtpu: 0.0.40
codegen_flags: <defaults>
</compile_context>

<pallas_src>
import jax
import jax.numpy as jnp
from jax.experimental import pallas as pl
from jax.experimental.pallas import tpu as pltpu


# ---------------- synthetic heterogeneous graph definition ----------------
NTYPES = {"application": 16, "api": 24}
CANONICAL_ETYPES = [
    ("api", "called_by", "application"),
    ("application", "calls", "api"),
    ("application", "similar_to", "application"),
]


# ---------------- fused Pallas kernel (whole forward pass) ----------------
def _fused_forward_kernel(
    x_app_ref, x_api_ref,        # (n_app, d_in), (n_api, d_in)
    a_app_ref, a_calls_ref,      # (n_app, n_api + n_app) = [A_cb | A_sim], (n_api, n_app)
    s1a_ref,                     # (3*d_in + 1, hidden)  conv1 dst=application slab (W stack; bias row)
    s1b_ref,                     # (2*d_in + 1, hidden)  conv1 dst=api slab
    s2_ref,                      # (3*hidden + 1, out)   conv2 slab with classifier folded in
    out_ref,                     # (n_app, out)
    bd1_ref, z1a_ref, z1b_ref, bd2_ref, z2_ref,   # VMEM scratch
):
    f32 = jnp.float32
    n_app, d_in = x_app_ref.shape
    n_api = x_api_ref.shape[0]
    hidden = s1a_ref.shape[1]

    x_app = x_app_ref[...]
    x_api = x_api_ref[...]
    a_app = a_app_ref[...]       # [A_called_by | A_similar_to]

    # ---------------- conv1, dst = application ----------------
    # blockdiag(x_api, x_app): ONE dot emits [A_cb @ x_api | A_sim @ x_app] lane-adjacent.
    bd1_ref[...] = jnp.zeros_like(bd1_ref)
    bd1_ref[0:n_api, 0:d_in] = x_api
    bd1_ref[n_api:n_api + n_app, d_in:2 * d_in] = x_app
    neigh1 = jnp.dot(a_app, bd1_ref[...], preferred_element_type=f32)      # (n_app, 2*d_in)

    # stacked-K: z = [x_app | neigh_cb | neigh_sim], W = [W_self_sum; W_n_cb; W_n_sim]
    z1a_ref[:, 0:d_in] = x_app
    z1a_ref[:, d_in:3 * d_in] = neigh1
    k1a = 3 * d_in
    h1_app = (jnp.dot(z1a_ref[...], s1a_ref[0:k1a, :], preferred_element_type=f32)
              + s1a_ref[k1a:k1a + 1, :])
    h1_app = jnp.maximum(h1_app, 0.0)                                       # ReLU

    # ---------------- conv1, dst = api ('calls' relation only) ----------------
    neigh_calls = jnp.dot(a_calls_ref[...], x_app, preferred_element_type=f32)  # (n_api, d_in)
    z1b_ref[:, 0:d_in] = x_api
    z1b_ref[:, d_in:2 * d_in] = neigh_calls
    k1b = 2 * d_in
    h1_api = (jnp.dot(z1b_ref[...], s1b_ref[0:k1b, :], preferred_element_type=f32)
              + s1b_ref[k1b:k1b + 1, :])
    h1_api = jnp.maximum(h1_api, 0.0)                                       # ReLU

    # ------- conv2 (dst = application) with the classifier folded into the weights -------
    bd2_ref[...] = jnp.zeros_like(bd2_ref)
    bd2_ref[0:n_api, 0:hidden] = h1_api
    bd2_ref[n_api:n_api + n_app, hidden:2 * hidden] = h1_app
    neigh2 = jnp.dot(a_app, bd2_ref[...], preferred_element_type=f32)       # (n_app, 2*hidden)

    z2_ref[:, 0:hidden] = h1_app
    z2_ref[:, hidden:3 * hidden] = neigh2
    k2 = 3 * hidden
    out_ref[...] = (jnp.dot(z2_ref[...], s2_ref[0:k2, :], preferred_element_type=f32)
                    + s2_ref[k2:k2 + 1, :])


def hetero_graphsage_forward(x_app, x_api, a_app_cat, a_calls, slab1_app, slab1_api, slab2):
    n_app, d_in = x_app.shape
    n_api = x_api.shape[0]
    hidden = slab1_app.shape[1]
    out_size = slab2.shape[1]

    flops = 2 * (
        n_app * (n_api + n_app) * (2 * d_in)        # blockdiag adjacency dot, conv1
        + n_api * n_app * d_in                      # 'calls' adjacency dot
        + n_app * (3 * d_in) * hidden               # conv1-app stacked-K dot
        + n_api * (2 * d_in) * hidden               # conv1-api stacked-K dot
        + n_app * (n_api + n_app) * (2 * hidden)    # blockdiag adjacency dot, conv2
        + n_app * (3 * hidden) * out_size           # conv2 + classifier folded dot
    )
    bytes_accessed = 4 * (x_app.size + x_api.size + a_app_cat.size + a_calls.size
                          + slab1_app.size + slab1_api.size + slab2.size
                          + n_app * out_size)

    return pl.pallas_call(
        _fused_forward_kernel,
        out_shape=jax.ShapeDtypeStruct((n_app, out_size), jnp.float32),
        # No grid / no BlockSpecs: whole arrays land in VMEM; a size-1 grid only adds
        # pipeline prologue/epilogue bookkeeping.
        scratch_shapes=[
            pltpu.VMEM((n_api + n_app, 2 * d_in), jnp.float32),     # bd1: blockdiag(x_api, x_app)
            pltpu.VMEM((n_app, 3 * d_in), jnp.float32),             # z1a: [x_app | neigh_cb | neigh_sim]
            pltpu.VMEM((n_api, 2 * d_in), jnp.float32),             # z1b: [x_api | neigh_calls]
            pltpu.VMEM((n_api + n_app, 2 * hidden), jnp.float32),   # bd2: blockdiag(h1_api, h1_app)
            pltpu.VMEM((n_app, 3 * hidden), jnp.float32),           # z2 : [h1_app | neigh_cb2 | neigh_sim2]
        ],
        cost_estimate=pl.CostEstimate(flops=flops, transcendentals=0,
                                      bytes_accessed=bytes_accessed),
    )(x_app, x_api, a_app_cat, a_calls, slab1_app, slab1_api, slab2)


# ---------------- one-time packing (NOT in the per-call path) ----------------
def pack_params(params):
    """Fold + stack parameters into three lane-dense slabs (done once at setup time)."""
    c1, c2, cls = params["conv1"], params["conv2"], params["classify"]

    # HeteroGraphConv(aggregate='sum'): dst='application' is fed by 'called_by' and
    # 'similar_to'; both self paths share the same dst features, so
    # x@Wa + x@Wb == x@(Wa+Wb); biases sum likewise.
    w1_app = jnp.concatenate(
        [c1["called_by"]["w_self"] + c1["similar_to"]["w_self"],   # K rows 0:d        <- x_app
         c1["called_by"]["w_neigh"],                               # K rows d:2d       <- A_cb  @ x_api
         c1["similar_to"]["w_neigh"]], axis=0)                     # K rows 2d:3d      <- A_sim @ x_app
    b1_app = (c1["called_by"]["b"] + c1["similar_to"]["b"]).reshape(1, -1)
    slab1_app = jnp.concatenate([w1_app, b1_app], axis=0)          # (3*d_in + 1, hidden)

    w1_api = jnp.concatenate([c1["calls"]["w_self"], c1["calls"]["w_neigh"]], axis=0)
    b1_api = c1["calls"]["b"].reshape(1, -1)
    slab1_api = jnp.concatenate([w1_api, b1_api], axis=0)          # (2*d_in + 1, hidden)

    # conv2 dst='application' stacked weights (conv2['calls'] (dst='api') never reaches the
    # classifier and is dropped). Classifier folded in (exact algebra):
    #   (z @ W2 + b2) @ Wc + bc == z @ (W2 @ Wc) + (b2 @ Wc + bc)
    w2_app = jnp.concatenate(
        [c2["called_by"]["w_self"] + c2["similar_to"]["w_self"],
         c2["called_by"]["w_neigh"],
         c2["similar_to"]["w_neigh"]], axis=0)                     # (3*hidden, hidden)
    b2_app = (c2["called_by"]["b"] + c2["similar_to"]["b"]).reshape(1, -1)
    w2c = w2_app @ cls["w"]                                        # (3*hidden, out)
    b2c = b2_app @ cls["w"] + cls["b"].reshape(1, -1)              # (1, out)
    slab2 = jnp.concatenate([w2c, b2c], axis=0)                    # (3*hidden + 1, out)
    return slab1_app, slab1_api, slab2


def pack_adjacencies(adjs):
    """[A_called_by | A_similar_to] (both dst='application') packed once for the blockdiag dot."""
    return jnp.concatenate([adjs["called_by"], adjs["similar_to"]], axis=1), adjs["calls"]


# ---------------- deterministic parameter / graph construction ----------------
def init_params(key, in_size, hidden_size, out_size):
    def dense(k, shape, scale=0.1):
        return scale * jax.random.normal(k, shape, jnp.float32)

    keys = iter(jax.random.split(key, 64))
    params = {"conv1": {}, "conv2": {}}
    for (_, rel, _) in CANONICAL_ETYPES:
        params["conv1"][rel] = {
            "w_self": dense(next(keys), (in_size, hidden_size)),
            "w_neigh": dense(next(keys), (in_size, hidden_size)),
            "b": dense(next(keys), (hidden_size,)),
        }
        params["conv2"][rel] = {
            "w_self": dense(next(keys), (hidden_size, hidden_size)),
            "w_neigh": dense(next(keys), (hidden_size, hidden_size)),
            "b": dense(next(keys), (hidden_size,)),
        }
    params["classify"] = {
        "w": dense(next(keys), (hidden_size, out_size)),
        "b": dense(next(keys), (out_size,)),
    }
    return params


def build_adjacencies(key, n_edges_per_rel=48):
    """Dense, in-degree-normalized, edge-weighted adjacency per relation
    (== DGL u_mul_e('h','edge_weight') followed by fn.mean)."""
    adjs = {}
    keys = iter(jax.random.split(key, 3 * len(CANONICAL_ETYPES)))
    for (src_t, rel, dst_t) in CANONICAL_ETYPES:
        n_src, n_dst = NTYPES[src_t], NTYPES[dst_t]
        src_idx = jax.random.randint(next(keys), (n_edges_per_rel,), 0, n_src)
        dst_idx = jax.random.randint(next(keys), (n_edges_per_rel,), 0, n_dst)
        w = jax.random.uniform(next(keys), (n_edges_per_rel,), jnp.float32, 0.5, 1.5)
        a = jnp.zeros((n_dst, n_src), jnp.float32).at[dst_idx, src_idx].add(w)
        deg = jnp.zeros((n_dst,), jnp.float32).at[dst_idx].add(1.0)
        adjs[rel] = a / jnp.maximum(deg, 1.0)[:, None]
    return adjs


# ---------------- unfused per-relation reference (for numerical self-check) ----------------
def _reference_forward(x, adjs, params):
    def sage(a, h_src, h_dst, p):
        return h_dst @ p["w_self"] + (a @ h_src) @ p["w_neigh"] + p["b"]

    c1, c2 = params["conv1"], params["conv2"]
    h1_app = jax.nn.relu(
        sage(adjs["called_by"], x["api"], x["application"], c1["called_by"])
        + sage(adjs["similar_to"], x["application"], x["application"], c1["similar_to"]))
    h1_api = jax.nn.relu(sage(adjs["calls"], x["application"], x["api"], c1["calls"]))
    h2_app = (sage(adjs["called_by"], h1_api, h1_app, c2["called_by"])
              + sage(adjs["similar_to"], h1_app, h1_app, c2["similar_to"]))
    return h2_app @ params["classify"]["w"] + params["classify"]["b"]


if __name__ == "__main__":
    in_size, hidden_size, out_size = 8, 32, 5

    key = jax.random.PRNGKey(0)
    k_graph, k_param, k_x = jax.random.split(key, 3)

    adjs = build_adjacencies(k_graph)
    params = init_params(k_param, in_size, hidden_size, out_size)

    xkeys = jax.random.split(k_x, len(NTYPES))
    x = {
        nt: jax.random.normal(k, (n, in_size), jnp.float32)
        for (nt, n), k in zip(NTYPES.items(), xkeys)
    }

    # One-time packing (outside the per-call path).
    a_app_cat, a_calls = pack_adjacencies(adjs)
    slab1_app, slab1_api, slab2 = pack_params(params)

    fwd = jax.jit(hetero_graphsage_forward)
    out = fwd(x["application"], x["api"], a_app_cat, a_calls, slab1_app, slab1_api, slab2)
    out = jax.block_until_ready(out)

    assert out.shape == (NTYPES["application"], out_size)
    assert out.dtype == jnp.float32

    ref = _reference_forward(x, adjs, params)
    assert jnp.allclose(out, ref, rtol=2e-4, atol=2e-4), float(jnp.max(jnp.abs(out - ref)))

    print("KERNEL_OK")
</pallas_src>

<mosaic_0001>
module attributes {stable_mosaic.version = 11 : i64} {
  func.func @_fused_forward_kernel(%arg0: memref<16x8xf32, #tpu.memory_space<vmem>>, %arg1: memref<24x8xf32, #tpu.memory_space<vmem>>, %arg2: memref<16x40xf32, #tpu.memory_space<vmem>>, %arg3: memref<24x16xf32, #tpu.memory_space<vmem>>, %arg4: memref<25x32xf32, #tpu.memory_space<vmem>>, %arg5: memref<17x32xf32, #tpu.memory_space<vmem>>, %arg6: memref<97x5xf32, #tpu.memory_space<vmem>>, %arg7: memref<16x5xf32, #tpu.memory_space<vmem>>, %arg8: memref<40x16xf32, #tpu.memory_space<vmem>>, %arg9: memref<16x24xf32, #tpu.memory_space<vmem>>, %arg10: memref<24x16xf32, #tpu.memory_space<vmem>>, %arg11: memref<40x64xf32, #tpu.memory_space<vmem>>, %arg12: memref<16x96xf32, #tpu.memory_space<vmem>>) attributes {dimension_semantics = [], scalar_prefetch = 0 : i64, scratch_operands = 5 : i64, tpu.core_type = #tpu.core_type<tc>} {
    %c0 = arith.constant 0 : index
    %c0_0 = arith.constant 0 : index
    %0 = vector.load %arg0[%c0, %c0_0] : memref<16x8xf32, #tpu.memory_space<vmem>>, vector<16x8xf32>
    %c0_1 = arith.constant 0 : index
    %c0_2 = arith.constant 0 : index
    %1 = vector.load %arg1[%c0_1, %c0_2] : memref<24x8xf32, #tpu.memory_space<vmem>>, vector<24x8xf32>
    %c0_3 = arith.constant 0 : index
    %c0_4 = arith.constant 0 : index
    %2 = vector.load %arg2[%c0_3, %c0_4] : memref<16x40xf32, #tpu.memory_space<vmem>>, vector<16x40xf32>
    %cst = arith.constant 0.000000e+00 : f32
    %3 = vector.broadcast %cst : f32 to vector<40x16xf32>
    %c0_5 = arith.constant 0 : index
    %c0_6 = arith.constant 0 : index
    %4 = vector.load %arg8[%c0_5, %c0_6] : memref<40x16xf32, #tpu.memory_space<vmem>>, vector<40x16xf32>
    tpu.vector_store %arg8[%c0_5, %c0_6], %3 {strides = array<i32>} : memref<40x16xf32, #tpu.memory_space<vmem>>, vector<40x16xf32>,
    %c0_7 = arith.constant 0 : index
    %c0_8 = arith.constant 0 : index
    %5 = vector.load %arg8[%c0_7, %c0_8] : memref<40x16xf32, #tpu.memory_space<vmem>>, vector<24x8xf32>
    tpu.vector_store %arg8[%c0_7, %c0_8], %1 {strides = array<i32>} : memref<40x16xf32, #tpu.memory_space<vmem>>, vector<24x8xf32>,
    %c24 = arith.constant 24 : index
    %c8 = arith.constant 8 : index
    %6 = vector.load %arg8[%c24, %c8] : memref<40x16xf32, #tpu.memory_space<vmem>>, vector<16x8xf32>
    tpu.vector_store %arg8[%c24, %c8], %0 {strides = array<i32>} : memref<40x16xf32, #tpu.memory_space<vmem>>, vector<16x8xf32>,
    %c0_9 = arith.constant 0 : index
    %c0_10 = arith.constant 0 : index
    %7 = vector.load %arg8[%c0_9, %c0_10] : memref<40x16xf32, #tpu.memory_space<vmem>>, vector<40x16xf32>
    %cst_11 = arith.constant dense<0.000000e+00> : vector<16x16xf32>
    %8 = tpu.matmul %2, %7, %cst_11 {dimension_numbers = #tpu.dot_dimension_numbers<[1], [0], [0], [1], [0, 0, 1, 1], [], []>} : vector<16x40xf32>, vector<40x16xf32>, vector<16x16xf32> -> vector<16x16xf32>
    %c0_12 = arith.constant 0 : index
    %c0_13 = arith.constant 0 : index
    %9 = vector.load %arg9[%c0_12, %c0_13] : memref<16x24xf32, #tpu.memory_space<vmem>>, vector<16x8xf32>
    tpu.vector_store %arg9[%c0_12, %c0_13], %0 {strides = array<i32>} : memref<16x24xf32, #tpu.memory_space<vmem>>, vector<16x8xf32>,
    %c0_14 = arith.constant 0 : index
    %c8_15 = arith.constant 8 : index
    %10 = vector.load %arg9[%c0_14, %c8_15] : memref<16x24xf32, #tpu.memory_space<vmem>>, vector<16x16xf32>
    tpu.vector_store %arg9[%c0_14, %c8_15], %8 {strides = array<i32>} : memref<16x24xf32, #tpu.memory_space<vmem>>, vector<16x16xf32>,
    %c0_16 = arith.constant 0 : index
    %c0_17 = arith.constant 0 : index
    %11 = vector.load %arg9[%c0_16, %c0_17] : memref<16x24xf32, #tpu.memory_space<vmem>>, vector<16x24xf32>
    %c0_18 = arith.constant 0 : index
    %c0_19 = arith.constant 0 : index
    %12 = vector.load %arg4[%c0_18, %c0_19] : memref<25x32xf32, #tpu.memory_space<vmem>>, vector<24x32xf32>
    %cst_20 = arith.constant dense<0.000000e+00> : vector<16x32xf32>
    %13 = tpu.matmul %11, %12, %cst_20 {dimension_numbers = #tpu.dot_dimension_numbers<[1], [0], [0], [1], [0, 0, 1, 1], [], []>} : vector<16x24xf32>, vector<24x32xf32>, vector<16x32xf32> -> vector<16x32xf32>
    %c24_21 = arith.constant 24 : index
    %c0_22 = arith.constant 0 : index
    %14 = vector.load %arg4[%c24_21, %c0_22] : memref<25x32xf32, #tpu.memory_space<vmem>>, vector<1x32xf32>
    %15 = vector.broadcast %14 : vector<1x32xf32> to vector<16x32xf32>
    %16 = arith.addf %13, %15 : vector<16x32xf32>
    %cst_23 = arith.constant 0.000000e+00 : f32
    %17 = vector.broadcast %cst_23 : f32 to vector<16x32xf32>
    %18 = arith.maximumf %16, %17 : vector<16x32xf32>
    %c0_24 = arith.constant 0 : index
    %c0_25 = arith.constant 0 : index
    %19 = vector.load %arg3[%c0_24, %c0_25] : memref<24x16xf32, #tpu.memory_space<vmem>>, vector<24x16xf32>
    %cst_26 = arith.constant dense<0.000000e+00> : vector<24x8xf32>
    %20 = tpu.matmul %19, %0, %cst_26 {dimension_numbers = #tpu.dot_dimension_numbers<[1], [0], [0], [1], [0, 0, 1, 1], [], []>} : vector<24x16xf32>, vector<16x8xf32>, vector<24x8xf32> -> vector<24x8xf32>
    %c0_27 = arith.constant 0 : index
    %c0_28 = arith.constant 0 : index
    %21 = vector.load %arg10[%c0_27, %c0_28] : memref<24x16xf32, #tpu.memory_space<vmem>>, vector<24x8xf32>
    tpu.vector_store %arg10[%c0_27, %c0_28], %1 {strides = array<i32>} : memref<24x16xf32, #tpu.memory_space<vmem>>, vector<24x8xf32>,
    %c0_29 = arith.constant 0 : index
    %c8_30 = arith.constant 8 : index
    %22 = vector.load %arg10[%c0_29, %c8_30] : memref<24x16xf32, #tpu.memory_space<vmem>>, vector<24x8xf32>
    tpu.vector_store %arg10[%c0_29, %c8_30], %20 {strides = array<i32>} : memref<24x16xf32, #tpu.memory_space<vmem>>, vector<24x8xf32>,
    %c0_31 = arith.constant 0 : index
    %c0_32 = arith.constant 0 : index
    %23 = vector.load %arg10[%c0_31, %c0_32] : memref<24x16xf32, #tpu.memory_space<vmem>>, vector<24x16xf32>
    %c0_33 = arith.constant 0 : index
    %c0_34 = arith.constant 0 : index
    %24 = vector.load %arg5[%c0_33, %c0_34] : memref<17x32xf32, #tpu.memory_space<vmem>>, vector<16x32xf32>
    %cst_35 = arith.constant dense<0.000000e+00> : vector<24x32xf32>
    %25 = tpu.matmul %23, %24, %cst_35 {dimension_numbers = #tpu.dot_dimension_numbers<[1], [0], [0], [1], [0, 0, 1, 1], [], []>} : vector<24x16xf32>, vector<16x32xf32>, vector<24x32xf32> -> vector<24x32xf32>
    %c16 = arith.constant 16 : index
    %c0_36 = arith.constant 0 : index
    %26 = vector.load %arg5[%c16, %c0_36] : memref<17x32xf32, #tpu.memory_space<vmem>>, vector<1x32xf32>
    %27 = vector.broadcast %26 : vector<1x32xf32> to vector<24x32xf32>
    %28 = arith.addf %25, %27 : vector<24x32xf32>
    %cst_37 = arith.constant 0.000000e+00 : f32
    %29 = vector.broadcast %cst_37 : f32 to vector<24x32xf32>
    %30 = arith.maximumf %28, %29 : vector<24x32xf32>
    %cst_38 = arith.constant 0.000000e+00 : f32
    %31 = vector.broadcast %cst_38 : f32 to vector<40x64xf32>
    %c0_39 = arith.constant 0 : index
    %c0_40 = arith.constant 0 : index
    %32 = vector.load %arg11[%c0_39, %c0_40] : memref<40x64xf32, #tpu.memory_space<vmem>>, vector<40x64xf32>
    tpu.vector_store %arg11[%c0_39, %c0_40], %31 {strides = array<i32>} : memref<40x64xf32, #tpu.memory_space<vmem>>, vector<40x64xf32>,
    %c0_41 = arith.constant 0 : index
    %c0_42 = arith.constant 0 : index
    %33 = vector.load %arg11[%c0_41, %c0_42] : memref<40x64xf32, #tpu.memory_space<vmem>>, vector<24x32xf32>
    tpu.vector_store %arg11[%c0_41, %c0_42], %30 {strides = array<i32>} : memref<40x64xf32, #tpu.memory_space<vmem>>, vector<24x32xf32>,
    %c24_43 = arith.constant 24 : index
    %c32 = arith.constant 32 : index
    %34 = vector.load %arg11[%c24_43, %c32] : memref<40x64xf32, #tpu.memory_space<vmem>>, vector<16x32xf32>
    tpu.vector_store %arg11[%c24_43, %c32], %18 {strides = array<i32>} : memref<40x64xf32, #tpu.memory_space<vmem>>, vector<16x32xf32>,
    %c0_44 = arith.constant 0 : index
    %c0_45 = arith.constant 0 : index
    %35 = vector.load %arg11[%c0_44, %c0_45] : memref<40x64xf32, #tpu.memory_space<vmem>>, vector<40x64xf32>
    %cst_46 = arith.constant dense<0.000000e+00> : vector<16x64xf32>
    %36 = tpu.matmul %2, %35, %cst_46 {dimension_numbers = #tpu.dot_dimension_numbers<[1], [0], [0], [1], [0, 0, 1, 1], [], []>} : vector<16x40xf32>, vector<40x64xf32>, vector<16x64xf32> -> vector<16x64xf32>
    %c0_47 = arith.constant 0 : index
    %c0_48 = arith.constant 0 : index
    %37 = vector.load %arg12[%c0_47, %c0_48] : memref<16x96xf32, #tpu.memory_space<vmem>>, vector<16x32xf32>
    tpu.vector_store %arg12[%c0_47, %c0_48], %18 {strides = array<i32>} : memref<16x96xf32, #tpu.memory_space<vmem>>, vector<16x32xf32>,
    %c0_49 = arith.constant 0 : index
    %c32_50 = arith.constant 32 : index
    %38 = vector.load %arg12[%c0_49, %c32_50] : memref<16x96xf32, #tpu.memory_space<vmem>>, vector<16x64xf32>
    tpu.vector_store %arg12[%c0_49, %c32_50], %36 {strides = array<i32>} : memref<16x96xf32, #tpu.memory_space<vmem>>, vector<16x64xf32>,
    %c0_51 = arith.constant 0 : index
    %c0_52 = arith.constant 0 : index
    %39 = vector.load %arg12[%c0_51, %c0_52] : memref<16x96xf32, #tpu.memory_space<vmem>>, vector<16x96xf32>
    %c0_53 = arith.constant 0 : index
    %c0_54 = arith.constant 0 : index
    %40 = vector.load %arg6[%c0_53, %c0_54] : memref<97x5xf32, #tpu.memory_space<vmem>>, vector<96x5xf32>
    %cst_55 = arith.constant dense<0.000000e+00> : vector<16x5xf32>
    %41 = tpu.matmul %39, %40, %cst_55 {dimension_numbers = #tpu.dot_dimension_numbers<[1], [0], [0], [1], [0, 0, 1, 1], [], []>} : vector<16x96xf32>, vector<96x5xf32>, vector<16x5xf32> -> vector<16x5xf32>
    %c96 = arith.constant 96 : index
    %c0_56 = arith.constant 0 : index
    %42 = vector.load %arg6[%c96, %c0_56] : memref<97x5xf32, #tpu.memory_space<vmem>>, vector<1x5xf32>
    %43 = vector.broadcast %42 : vector<1x5xf32> to vector<16x5xf32>
    %44 = arith.addf %41, %43 : vector<16x5xf32>
    %c0_57 = arith.constant 0 : index
    %c0_58 = arith.constant 0 : index
    %45 = vector.load %arg7[%c0_57, %c0_58] : memref<16x5xf32, #tpu.memory_space<vmem>>, vector<16x5xf32>
    tpu.vector_store %arg7[%c0_57, %c0_58], %44 {strides = array<i32>} : memref<16x5xf32, #tpu.memory_space<vmem>>, vector<16x5xf32>,
    return
  }
}

</mosaic_0001>

<llo_original>
// kernel: hetero_graphsage_forward.1
$region0: #{hetero_graphsage_forward.1}
  #allocation0 [shape = 'u32[]', space=smem, size = 0x4, offset = 0x4, fixed_abs, tag = 'smem constant byte address 0x4 - core index']
  #allocation1 [shape = 'u32[144,128]{1,0:T(1,128)}', space=vmem, size = 0x12000, scoped, tag = 'internal scratch']
  #allocation2 [shape = 'f32[40,16]{1,0:T(8,128)}', space=vmem, size = 0x5000, scoped, tag = 'scratch operand']
  #allocation3 [shape = 'f32[16,24]{1,0:T(8,128)}', space=vmem, size = 0x2000, scoped, tag = 'scratch operand']
  #allocation4 [shape = 'f32[24,16]{1,0:T(8,128)}', space=vmem, size = 0x3000, scoped, tag = 'scratch operand']
  #allocation5 [shape = 'f32[40,64]{1,0:T(8,128)}', space=vmem, size = 0x5000, scoped, tag = 'scratch operand']
  #allocation6 [shape = 'f32[16,96]{1,0:T(8,128)}', space=vmem, size = 0x2000, scoped, tag = 'scratch operand']
  %s0 = inlined_call_operand.vmem [shape: f32[16,8], index: 0, kind: input, shape index: {}]
  %s1 = inlined_call_operand.vmem [shape: f32[24,8], index: 1, kind: input, shape index: {}]
  %s2 = inlined_call_operand.vmem [shape: f32[16,40], index: 2, kind: input, shape index: {}]
  %s3 = inlined_call_operand.vmem [shape: f32[24,16], index: 3, kind: input, shape index: {}]
  %s4 = inlined_call_operand.vmem [shape: f32[25,32], index: 4, kind: input, shape index: {}]
  %s5 = inlined_call_operand.vmem [shape: f32[17,32], index: 5, kind: input, shape index: {}]
  %s6 = inlined_call_operand.vmem [shape: f32[97,5], index: 6, kind: input, shape index: {}]
  %s7 = inlined_call_operand.vmem [shape: f32[16,5], index: 7, kind: output, shape index: {}]
  %s8 = sld [smem:[#allocation0]]
  $region38: #{hetero_graphsage_forward.1} parent=0
    _
  %s10 = ssub.s32 1, %s8
  %s11 = scalar_select 0, %s10, %s8
  // Predicated region
  $region2: #{hetero_graphsage_forward.1} parent=0 // pred_check
    _
  $region3: #{hetero_graphsage_forward.1} parent=0 // pred_check_branch
    %13 = sbr.rel (0) target = $region5
  $region4: #{hetero_graphsage_forward.1} parent=0 // pred_region
    _
  $region5: #{hetero_graphsage_forward.1} parent=0 // pred_fallthru
    _
  // Predicated region
  $region6: #{hetero_graphsage_forward.1} parent=0 // pred_check
    _
  $region7: #{hetero_graphsage_forward.1} parent=0 // pred_check_branch
    %15 = sbr.rel (0) target = $region9
  $region8: #{hetero_graphsage_forward.1} parent=0 // pred_region
    _
  $region9: #{hetero_graphsage_forward.1} parent=0 // pred_fallthru
    _
  // Predicated region
  $region10: #{hetero_graphsage_forward.1} parent=0 // pred_check
    _
  $region11: #{hetero_graphsage_forward.1} parent=0 // pred_check_branch
    %17 = sbr.rel (0) target = $region13
  $region12: #{hetero_graphsage_forward.1} parent=0 // pred_region
    _
  $region13: #{hetero_graphsage_forward.1} parent=0 // pred_fallthru
    _
  // Predicated region
  $region14: #{hetero_graphsage_forward.1} parent=0 // pred_check
    _
  $region15: #{hetero_graphsage_forward.1} parent=0 // pred_check_branch
    %19 = sbr.rel (0) target = $region17
  $region16: #{hetero_graphsage_forward.1} parent=0 // pred_region
    _
  $region17: #{hetero_graphsage_forward.1} parent=0 // pred_fallthru
    _
  // Predicated region
  $region18: #{hetero_graphsage_forward.1} parent=0 // pred_check
    _
  $region19: #{hetero_graphsage_forward.1} parent=0 // pred_check_branch
    %21 = sbr.rel (0) target = $region21
  $region20: #{hetero_graphsage_forward.1} parent=0 // pred_region
    _
  $region21: #{hetero_graphsage_forward.1} parent=0 // pred_fallthru
    _
  // Predicated region
  $region22: #{hetero_graphsage_forward.1} parent=0 // pred_check
    _
  $region23: #{hetero_graphsage_forward.1} parent=0 // pred_check_branch
    %23 = sbr.rel (0) target = $region25
  $region24: #{hetero_graphsage_forward.1} parent=0 // pred_region
    _
  $region25: #{hetero_graphsage_forward.1} parent=0 // pred_fallthru
    _
  // Predicated region
  $region26: #{hetero_graphsage_forward.1} parent=0 // pred_check
    _
  $region27: #{hetero_graphsage_forward.1} parent=0 // pred_check_branch
    %25 = sbr.rel (0) target = $region29
  $region28: #{hetero_graphsage_forward.1} parent=0 // pred_region
    _
  $region29: #{hetero_graphsage_forward.1} parent=0 // pred_fallthru
    _
  %v26 = vld [vmem:[%s0] sm:$0xff]
  %v27 = vld [vmem:[%s0 + $0x8] sm:$0xff]
  %v28 = vld [vmem:[%s1] sm:$0xff]
  %v29 = vld [vmem:[%s1 + $0x8] sm:$0xff]
  %v30 = vld [vmem:[%s1 + $0x10] sm:$0xff]
  %v31 = vld [vmem:[%s2] sm:$0xff]
  %v32 = vld [vmem:[%s2 + $0x8] sm:$0xff]
  %vm33 = vcmask 130048
  %34 = vst.msk [vmem:[#allocation2] sm:$0xff] %vm33, 0.0
  %35 = vst.msk [vmem:[#allocation2 + $0x8] sm:$0xff] %vm33, 0.0
  %36 = vst.msk [vmem:[#allocation2 + $0x10] sm:$0xff] %vm33, 0.0
  %37 = vst.msk [vmem:[#allocation2 + $0x18] sm:$0xff] %vm33, 0.0
  %38 = vst.msk [vmem:[#allocation2 + $0x20] sm:$0xff] %vm33, 0.0
  %vm39 = vcmask 64512
  %40 = vst.msk [vmem:[#allocation2] sm:$0xff] %vm39, %v28
  %41 = vst.msk [vmem:[#allocation2 + $0x8] sm:$0xff] %vm39, %v29
  %42 = vst.msk [vmem:[#allocation2 + $0x10] sm:$0xff] %vm39, %v30
  %45 = vrot.lane.b32.xlu0 %v26, 8
  %v46 = vpop.permute.xlu0 %45
  %47 = vrot.lane.b32.xlu0 %v27, 8
  %v48 = vpop.permute.xlu0 %47
  %vm51 = vcmask 130112
  %52 = vst.msk [vmem:[#allocation2 + $0x18] sm:$0xff] %vm51, %v46
  %53 = vst.msk [vmem:[#allocation2 + $0x20] sm:$0xff] %vm51, %v48
  %v54 = vld [vmem:[#allocation2] sm:$0xff]
  %v55 = vld [vmem:[#allocation2 + $0x8] sm:$0xff]
  %v56 = vld [vmem:[#allocation2 + $0x10] sm:$0xff]
  %v57 = vld [vmem:[#allocation2 + $0x18] sm:$0xff]
  %v58 = vld [vmem:[#allocation2 + $0x20] sm:$0xff]
  %vm59 = vcmask 326656
  %v61 = vsel %vm59, %v31, 0
  %v64 = vsel %vm59, %v32, 0
  %66 = vmatprep.subr.mxu0 0.0
  %67 = vmatpush1.msra.mxu0 %v54
  %68 = vmatprep.subr.mxu0 0.0
  %69 = vmatpush1.msra.mxu0 %v55
  %70 = vmatprep.subr.mxu0 0.0
  %71 = vmatpush1.msra.mxu0 %v56
  %72 = vmatprep.subr.mxu0 0.0
  %73 = vmatpush1.msra.mxu0 %v57
  %74 = vmatprep.subr.mxu0 0.0
  %75 = vmatpush1.msra.mxu0 %v58
  %76 = vmatprep.subr.mxu0 0.0
  %77 = vmatpush1.msra.mxu0 0.0
  %78 = vmatprep.subr.mxu0 0.0
  %79 = vmatpush1.msra.mxu0 0.0
  %80 = vmatprep.subr.mxu0 0.0
  %81 = vmatpush1.msra.mxu0 0.0
  %82 = vmatprep.subr.mxu0 0.0
  %83 = vmatpush1.msra.mxu0 0.0
  %84 = vmatprep.subr.mxu0 0.0
  %85 = vmatpush1.msra.mxu0 0.0
  %86 = vmatprep.subr.mxu0 0.0
  %87 = vmatpush1.msra.mxu0 0.0
  %88 = vmatprep.subr.mxu0 0.0
  %89 = vmatpush1.msra.mxu0 0.0
  %90 = vmatprep.subr.mxu0 0.0
  %91 = vmatpush1.msra.mxu0 0.0
  %92 = vmatprep.subr.mxu0 0.0
  %93 = vmatpush1.msra.mxu0 0.0
  %94 = vmatprep.subr.mxu0 0.0
  %95 = vmatpush1.msra.mxu0 0.0
  %96 = vmatprep.subr.mxu0 0.0
  %97 = vmatpush1.msra.mxu0 0.0
  %98 = vmatprep.subr.mxu0 0.0
  %99 = vmatpush1.msra.mxu0 0.0
  %100 = vmatprep.subr.mxu0 0.0
  %101 = vmatpush1.msra.mxu0 0.0
  %102 = vmatprep.subr.mxu0 0.0
  %103 = vmatpush1.msra.mxu0 0.0
  %104 = vmatprep.subr.mxu0 0.0
  %105 = vmatpush1.msra.mxu0 0.0
  %106 = vmatprep.subr.mxu0 0.0
  %107 = vmatpush1.msra.mxu0 0.0
  %108 = vmatprep.subr.mxu0 0.0
  %109 = vmatpush1.msra.mxu0 0.0
  %110 = vmatprep.subr.mxu0 0.0
  %111 = vmatpush1.msra.mxu0 0.0
  %112 = vmatprep.subr.mxu0 0.0
  %113 = vmatpush1.msra.mxu0 0.0
  %114 = vmatprep.subr.mxu0 0.0
  %115 = vmatpush1.msra.mxu0 0.0
  %116 = vmatprep.subr.mxu0 0.0
  %117 = vmatpush1.msra.mxu0 0.0
  %118 = vmatprep.subr.mxu0 0.0
  %119 = vmatpush1.msra.mxu0 0.0
  %120 = vmatprep.subr.mxu0 0.0
  %121 = vmatpush1.msra.mxu0 0.0
  %122 = vmatprep.subr.mxu0 0.0
  %123 = vmatpush1.msra.mxu0 0.0
  %124 = vmatprep.subr.mxu0 0.0
  %125 = vmatpush1.msra.mxu0 0.0
  %126 = vmatprep.subr.mxu0 0.0
  %127 = vmatpush1.msra.mxu0 0.0
  %128 = vmatprep.subr.mxu0 0.0
  %129 = vmatpush1.msra.mxu0 0.0
  %130 = vmatprep.mubr.f32.mxu0 0.0
  %131 = vmatmul.mubr.f32.gmra.mrb[0].mxu0 %v61
  %v132 = vpop.f32.mrb[0].mxu0
  %v133 = vadd.f32 0.0, %v132
  %v134 = vpop.f32.mrb[0].mxu0
  %135 = vmatprep.mubr.f32.mxu0 0.0
  %136 = vmatmul.mubr.f32.gmra.mrb[0].mxu0 %v64
  %v137 = vpop.f32.mrb[0].mxu0
  %v138 = vadd.f32 0.0, %v137
  %v139 = vpop.f32.mrb[0].mxu0
  %140 = vdwg.mxu0
  %141 = vst.msk [vmem:[#allocation3] sm:$0xff] %vm39, %v26
  %142 = vst.msk [vmem:[#allocation3 + $0x8] sm:$0xff] %vm39, %v27
  %145 = vrot.lane.b32.xlu0 %v133, 8
  %v146 = vpop.permute.xlu0 %145
  %147 = vrot.lane.b32.xlu0 %v138, 8
  %v148 = vpop.permute.xlu0 %147
  %vm151 = vcmask 195648
  %152 = vst.msk [vmem:[#allocation3] sm:$0xff] %vm151, %v146
  %153 = vst.msk [vmem:[#allocation3 + $0x8] sm:$0xff] %vm151, %v148
  %v154 = vld [vmem:[#allocation3] sm:$0xff]
  %v155 = vld [vmem:[#allocation3 + $0x8] sm:$0xff]
  %v156 = vld [vmem:[%s4] sm:$0xff]
  %v157 = vld [vmem:[%s4 + $0x8] sm:$0xff]
  %v158 = vld [vmem:[%s4 + $0x10] sm:$0xff]
  %v159 = vld [vmem:[%s4 + $0x18] sm:$0x1]
  %v160 = vlaneseq
  %v161 = vshrl.u32 %v160, 7
  %v162 = vsub.s32 0, %v161
  %v163 = vrot.slane %v159, %v162
  %vm164 = vcmask 195584
  %v166 = vsel %vm164, %v154, 0
  %v169 = vsel %vm164, %v155, 0
  %171 = vmatprep.subr.mxu0 0.0
  %172 = vmatpush1.msra.mxu0 %v156
  %173 = vmatprep.subr.mxu0 0.0
  %174 = vmatpush1.msra.mxu0 %v157
  %175 = vmatprep.subr.mxu0 0.0
  %176 = vmatpush1.msra.mxu0 %v158
  %177 = vmatprep.subr.mxu0 0.0
  %178 = vmatpush1.msra.mxu0 0.0
  %179 = vmatprep.subr.mxu0 0.0
  %180 = vmatpush1.msra.mxu0 0.0
  %181 = vmatprep.subr.mxu0 0.0
  %182 = vmatpush1.msra.mxu0 0.0
  %183 = vmatprep.subr.mxu0 0.0
  %184 = vmatpush1.msra.mxu0 0.0
  %185 = vmatprep.subr.mxu0 0.0
  %186 = vmatpush1.msra.mxu0 0.0
  %187 = vmatprep.subr.mxu0 0.0
  %188 = vmatpush1.msra.mxu0 0.0
  %189 = vmatprep.subr.mxu0 0.0
  %190 = vmatpush1.msra.mxu0 0.0
  %191 = vmatprep.subr.mxu0 0.0
  %192 = vmatpush1.msra.mxu0 0.0
  %193 = vmatprep.subr.mxu0 0.0
  %194 = vmatpush1.msra.mxu0 0.0
  %195 = vmatprep.subr.mxu0 0.0
  %196 = vmatpush1.msra.mxu0 0.0
  %197 = vmatprep.subr.mxu0 0.0
  %198 = vmatpush1.msra.mxu0 0.0
  %199 = vmatprep.subr.mxu0 0.0
  %200 = vmatpush1.msra.mxu0 0.0
  %201 = vmatprep.subr.mxu0 0.0
  %202 = vmatpush1.msra.mxu0 0.0
  %203 = vmatprep.subr.mxu0 0.0
  %204 = vmatpush1.msra.mxu0 0.0
  %205 = vmatprep.subr.mxu0 0.0
  %206 = vmatpush1.msra.mxu0 0.0
  %207 = vmatprep.subr.mxu0 0.0
  %208 = vmatpush1.msra.mxu0 0.0
  %209 = vmatprep.subr.mxu0 0.0
  %210 = vmatpush1.msra.mxu0 0.0
  %211 = vmatprep.subr.mxu0 0.0
  %212 = vmatpush1.msra.mxu0 0.0
  %213 = vmatprep.subr.mxu0 0.0
  %214 = vmatpush1.msra.mxu0 0.0
  %215 = vmatprep.subr.mxu0 0.0
  %216 = vmatpush1.msra.mxu0 0.0
  %217 = vmatprep.subr.mxu0 0.0
  %218 = vmatpush1.msra.mxu0 0.0
  %219 = vmatprep.subr.mxu0 0.0
  %220 = vmatpush1.msra.mxu0 0.0
  %221 = vmatprep.subr.mxu0 0.0
  %222 = vmatpush1.msra.mxu0 0.0
  %223 = vmatprep.subr.mxu0 0.0
  %224 = vmatpush1.msra.mxu0 0.0
  %225 = vmatprep.subr.mxu0 0.0
  %226 = vmatpush1.msra.mxu0 0.0
  %227 = vmatprep.subr.mxu0 0.0
  %228 = vmatpush1.msra.mxu0 0.0
  %229 = vmatprep.subr.mxu0 0.0
  %230 = vmatpush1.msra.mxu0 0.0
  %231 = vmatprep.subr.mxu0 0.0
  %232 = vmatpush1.msra.mxu0 0.0
  %233 = vmatprep.subr.mxu0 0.0
  %234 = vmatpush1.msra.mxu0 0.0
  %235 = vmatprep.mubr.f32.mxu0 0.0
  %236 = vmatmul.mubr.f32.gmra.mrb[0].mxu0 %v166
  %v237 = vpop.f32.mrb[0].mxu0
  %v238 = vadd.f32 %v163, %v237
  %v239 = vpop.f32.mrb[0].mxu0
  %240 = vmatprep.mubr.f32.mxu0 0.0
  %241 = vmatmul.mubr.f32.gmra.mrb[0].mxu0 %v169
  %v242 = vpop.f32.mrb[0].mxu0
  %v243 = vadd.f32 %v163, %v242
  %v244 = vpop.f32.mrb[0].mxu0
  %245 = vdwg.mxu0
  %v246 = vmax.f32 %v238, 0.0
  %v247 = vmax.f32 %v243, 0.0
  %v248 = vld [vmem:[%s3] sm:$0xff]
  %v249 = vld [vmem:[%s3 + $0x8] sm:$0xff]
  %v250 = vld [vmem:[%s3 + $0x10] sm:$0xff]
  %v252 = vsel %vm33, %v248, 0
  %v255 = vsel %vm33, %v249, 0
  %v258 = vsel %vm33, %v250, 0
  %260 = vmatprep.subr.mxu0 0.0
  %261 = vmatpush1.msra.mxu0 %v26
  %262 = vmatprep.subr.mxu0 0.0
  %263 = vmatpush1.msra.mxu0 %v27
  %264 = vmatprep.subr.mxu0 0.0
  %265 = vmatpush1.msra.mxu0 0.0
  %266 = vmatprep.subr.mxu0 0.0
  %267 = vmatpush1.msra.mxu0 0.0
  %268 = vmatprep.subr.mxu0 0.0
  %269 = vmatpush1.msra.mxu0 0.0
  %270 = vmatprep.subr.mxu0 0.0
  %271 = vmatpush1.msra.mxu0 0.0
  %272 = vmatprep.subr.mxu0 0.0
  %273 = vmatpush1.msra.mxu0 0.0
  %274 = vmatprep.subr.mxu0 0.0
  %275 = vmatpush1.msra.mxu0 0.0
  %276 = vmatprep.subr.mxu0 0.0
  %277 = vmatpush1.msra.mxu0 0.0
  %278 = vmatprep.subr.mxu0 0.0
  %279 = vmatpush1.msra.mxu0 0.0
  %280 = vmatprep.subr.mxu0 0.0
  %281 = vmatpush1.msra.mxu0 0.0
  %282 = vmatprep.subr.mxu0 0.0
  %283 = vmatpush1.msra.mxu0 0.0
  %284 = vmatprep.subr.mxu0 0.0
  %285 = vmatpush1.msra.mxu0 0.0
  %286 = vmatprep.subr.mxu0 0.0
  %287 = vmatpush1.msra.mxu0 0.0
  %288 = vmatprep.subr.mxu0 0.0
  %289 = vmatpush1.msra.mxu0 0.0
  %290 = vmatprep.subr.mxu0 0.0
  %291 = vmatpush1.msra.mxu0 0.0
  %292 = vmatprep.subr.mxu0 0.0
  %293 = vmatpush1.msra.mxu0 0.0
  %294 = vmatprep.subr.mxu0 0.0
  %295 = vmatpush1.msra.mxu0 0.0
  %296 = vmatprep.subr.mxu0 0.0
  %297 = vmatpush1.msra.mxu0 0.0
  %298 = vmatprep.subr.mxu0 0.0
  %299 = vmatpush1.msra.mxu0 0.0
  %300 = vmatprep.subr.mxu0 0.0
  %301 = vmatpush1.msra.mxu0 0.0
  %302 = vmatprep.subr.mxu0 0.0
  %303 = vmatpush1.msra.mxu0 0.0
  %304 = vmatprep.subr.mxu0 0.0
  %305 = vmatpush1.msra.mxu0 0.0
  %306 = vmatprep.subr.mxu0 0.0
  %307 = vmatpush1.msra.mxu0 0.0
  %308 = vmatprep.subr.mxu0 0.0
  %309 = vmatpush1.msra.mxu0 0.0
  %310 = vmatprep.subr.mxu0 0.0
  %311 = vmatpush1.msra.mxu0 0.0
  %312 = vmatprep.subr.mxu0 0.0
  %313 = vmatpush1.msra.mxu0 0.0
  %314 = vmatprep.subr.mxu0 0.0
  %315 = vmatpush1.msra.mxu0 0.0
  %316 = vmatprep.subr.mxu0 0.0
  %317 = vmatpush1.msra.mxu0 0.0
  %318 = vmatprep.subr.mxu0 0.0
  %319 = vmatpush1.msra.mxu0 0.0
  %320 = vmatprep.subr.mxu0 0.0
  %321 = vmatpush1.msra.mxu0 0.0
  %322 = vmatprep.subr.mxu0 0.0
  %323 = vmatpush1.msra.mxu0 0.0
  %324 = vmatprep.mubr.f32.mxu0 0.0
  %325 = vmatmul.mubr.f32.gmra.mrb[0].mxu0 %v252
  %v326 = vpop.f32.mrb[0].mxu0
  %v327 = vadd.f32 0.0, %v326
  %v328 = vpop.f32.mrb[0].mxu0
  %329 = vmatprep.mubr.f32.mxu0 0.0
  %330 = vmatmul.mubr.f32.gmra.mrb[0].mxu0 %v255
  %v331 = vpop.f32.mrb[0].mxu0
  %v332 = vadd.f32 0.0, %v331
  %v333 = vpop.f32.mrb[0].mxu0
  %334 = vmatprep.mubr.f32.mxu0 0.0
  %335 = vmatmul.mubr.f32.gmra.mrb[0].mxu0 %v258
  %v336 = vpop.f32.mrb[0].mxu0
  %v337 = vadd.f32 0.0, %v336
  %v338 = vpop.f32.mrb[0].mxu0
  %339 = vdwg.mxu0
  %340 = vst.msk [vmem:[#allocation4] sm:$0xff] %vm39, %v28
  %341 = vst.msk [vmem:[#allocation4 + $0x8] sm:$0xff] %vm39, %v29
  %342 = vst.msk [vmem:[#allocation4 + $0x10] sm:$0xff] %vm39, %v30
  %346 = vrot.lane.b32.xlu0 %v327, 8
  %v347 = vpop.permute.xlu0 %346
  %348 = vrot.lane.b32.xlu0 %v332, 8
  %v349 = vpop.permute.xlu0 %348
  %350 = vrot.lane.b32.xlu0 %v337, 8
  %v351 = vpop.permute.xlu0 %350
  %355 = vst.msk [vmem:[#allocation4] sm:$0xff] %vm51, %v347
  %356 = vst.msk [vmem:[#allocation4 + $0x8] sm:$0xff] %vm51, %v349
  %357 = vst.msk [vmem:[#allocation4 + $0x10] sm:$0xff] %vm51, %v351
  %v358 = vld [vmem:[#allocation4] sm:$0xff]
  %v359 = vld [vmem:[#allocation4 + $0x8] sm:$0xff]
  %v360 = vld [vmem:[#allocation4 + $0x10] sm:$0xff]
  %v361 = vld [vmem:[%s5] sm:$0xff]
  %v362 = vld [vmem:[%s5 + $0x8] sm:$0xff]
  %v363 = vld [vmem:[%s5 + $0x10] sm:$0x1]
  %v364 = vlaneseq
  %v365 = vshrl.u32 %v364, 7
  %v366 = vsub.s32 0, %v365
  %v367 = vrot.slane %v363, %v366
  %v369 = vsel %vm33, %v358, 0
  %v372 = vsel %vm33, %v359, 0
  %v375 = vsel %vm33, %v360, 0
  %377 = vmatprep.subr.mxu0 0.0
  %378 = vmatpush1.msra.mxu0 %v361
  %379 = vmatprep.subr.mxu0 0.0
  %380 = vmatpush1.msra.mxu0 %v362
  %381 = vmatprep.subr.mxu0 0.0
  %382 = vmatpush1.msra.mxu0 0.0
  %383 = vmatprep.subr.mxu0 0.0
  %384 = vmatpush1.msra.mxu0 0.0
  %385 = vmatprep.subr.mxu0 0.0
  %386 = vmatpush1.msra.mxu0 0.0
  %387 = vmatprep.subr.mxu0 0.0
  %388 = vmatpush1.msra.mxu0 0.0
  %389 = vmatprep.subr.mxu0 0.0
  %390 = vmatpush1.msra.mxu0 0.0
  %391 = vmatprep.subr.mxu0 0.0
  %392 = vmatpush1.msra.mxu0 0.0
  %393 = vmatprep.subr.mxu0 0.0
  %394 = vmatpush1.msra.mxu0 0.0
  %395 = vmatprep.subr.mxu0 0.0
  %396 = vmatpush1.msra.mxu0 0.0
  %397 = vmatprep.subr.mxu0 0.0
  %398 = vmatpush1.msra.mxu0 0.0
  %399 = vmatprep.subr.mxu0 0.0
  %400 = vmatpush1.msra.mxu0 0.0
  %401 = vmatprep.subr.mxu0 0.0
  %402 = vmatpush1.msra.mxu0 0.0
  %403 = vmatprep.subr.mxu0 0.0
  %404 = vmatpush1.msra.mxu0 0.0
  %405 = vmatprep.subr.mxu0 0.0
  %406 = vmatpush1.msra.mxu0 0.0
  %407 = vmatprep.subr.mxu0 0.0
  %408 = vmatpush1.msra.mxu0 0.0
  %409 = vmatprep.subr.mxu0 0.0
  %410 = vmatpush1.msra.mxu0 0.0
  %411 = vmatprep.subr.mxu0 0.0
  %412 = vmatpush1.msra.mxu0 0.0
  %413 = vmatprep.subr.mxu0 0.0
  %414 = vmatpush1.msra.mxu0 0.0
  %415 = vmatprep.subr.mxu0 0.0
  %416 = vmatpush1.msra.mxu0 0.0
  %417 = vmatprep.subr.mxu0 0.0
  %418 = vmatpush1.msra.mxu0 0.0
  %419 = vmatprep.subr.mxu0 0.0
  %420 = vmatpush1.msra.mxu0 0.0
  %421 = vmatprep.subr.mxu0 0.0
  %422 = vmatpush1.msra.mxu0 0.0
  %423 = vmatprep.subr.mxu0 0.0
  %424 = vmatpush1.msra.mxu0 0.0
  %425 = vmatprep.subr.mxu0 0.0
  %426 = vmatpush1.msra.mxu0 0.0
  %427 = vmatprep.subr.mxu0 0.0
  %428 = vmatpush1.msra.mxu0 0.0
  %429 = vmatprep.subr.mxu0 0.0
  %430 = vmatpush1.msra.mxu0 0.0
  %431 = vmatprep.subr.mxu0 0.0
  %432 = vmatpush1.msra.mxu0 0.0
  %433 = vmatprep.subr.mxu0 0.0
  %434 = vmatpush1.msra.mxu0 0.0
  %435 = vmatprep.subr.mxu0 0.0
  %436 = vmatpush1.msra.mxu0 0.0
  %437 = vmatprep.subr.mxu0 0.0
  %438 = vmatpush1.msra.mxu0 0.0
  %439 = vmatprep.subr.mxu0 0.0
  %440 = vmatpush1.msra.mxu0 0.0
  %441 = vmatprep.mubr.f32.mxu0 0.0
  %442 = vmatmul.mubr.f32.gmra.mrb[0].mxu0 %v369
  %v443 = vpop.f32.mrb[0].mxu0
  %v444 = vadd.f32 %v367, %v443
  %v445 = vpop.f32.mrb[0].mxu0
  %446 = vmatprep.mubr.f32.mxu0 0.0
  %447 = vmatmul.mubr.f32.gmra.mrb[0].mxu0 %v372
  %v448 = vpop.f32.mrb[0].mxu0
  %v449 = vadd.f32 %v367, %v448
  %v450 = vpop.f32.mrb[0].mxu0
  %451 = vmatprep.mubr.f32.mxu0 0.0
  %452 = vmatmul.mubr.f32.gmra.mrb[0].mxu0 %v375
  %v453 = vpop.f32.mrb[0].mxu0
  %v454 = vadd.f32 %v367, %v453
  %v455 = vpop.f32.mrb[0].mxu0
  %456 = vdwg.mxu0
  %v457 = vmax.f32 %v444, 0.0
  %v458 = vmax.f32 %v449, 0.0
  %v459 = vmax.f32 %v454, 0.0
  %vm460 = vcmask 523264
  %461 = vst.msk [vmem:[#allocation5] sm:$0xff] %vm460, 0.0
  %462 = vst.msk [vmem:[#allocation5 + $0x8] sm:$0xff] %vm460, 0.0
  %463 = vst.msk [vmem:[#allocation5 + $0x10] sm:$0xff] %vm460, 0.0
  %464 = vst.msk [vmem:[#allocation5 + $0x18] sm:$0xff] %vm460, 0.0
  %465 = vst.msk [vmem:[#allocation5 + $0x20] sm:$0xff] %vm460, 0.0
  %vm466 = vcmask 261120
  %467 = vst.msk [vmem:[#allocation5] sm:$0xff] %vm466, %v457
  %468 = vst.msk [vmem:[#allocation5 + $0x8] sm:$0xff] %vm466, %v458
  %469 = vst.msk [vmem:[#allocation5 + $0x10] sm:$0xff] %vm466, %v459
  %472 = vrot.lane.b32.xlu0 %v246, 32
  %v473 = vpop.permute.xlu0 %472
  %474 = vrot.lane.b32.xlu0 %v247, 32
  %v475 = vpop.permute.xlu0 %474
  %vm478 = vcmask 523520
  %479 = vst.msk [vmem:[#allocation5 + $0x18] sm:$0xff] %vm478, %v473
  %480 = vst.msk [vmem:[#allocation5 + $0x20] sm:$0xff] %vm478, %v475
  %v481 = vld [vmem:[#allocation5] sm:$0xff]
  %v482 = vld [vmem:[#allocation5 + $0x8] sm:$0xff]
  %v483 = vld [vmem:[#allocation5 + $0x10] sm:$0xff]
  %v484 = vld [vmem:[#allocation5 + $0x18] sm:$0xff]
  %v485 = vld [vmem:[#allocation5 + $0x20] sm:$0xff]
  %486 = vmatprep.subr.mxu0 0.0
  %487 = vmatpush1.msra.mxu0 %v481
  %488 = vmatprep.subr.mxu0 0.0
  %489 = vmatpush1.msra.mxu0 %v482
  %490 = vmatprep.subr.mxu0 0.0
  %491 = vmatpush1.msra.mxu0 %v483
  %492 = vmatprep.subr.mxu0 0.0
  %493 = vmatpush1.msra.mxu0 %v484
  %494 = vmatprep.subr.mxu0 0.0
  %495 = vmatpush1.msra.mxu0 %v485
  %496 = vmatprep.subr.mxu0 0.0
  %497 = vmatpush1.msra.mxu0 0.0
  %498 = vmatprep.subr.mxu0 0.0
  %499 = vmatpush1.msra.mxu0 0.0
  %500 = vmatprep.subr.mxu0 0.0
  %501 = vmatpush1.msra.mxu0 0.0
  %502 = vmatprep.subr.mxu0 0.0
  %503 = vmatpush1.msra.mxu0 0.0
  %504 = vmatprep.subr.mxu0 0.0
  %505 = vmatpush1.msra.mxu0 0.0
  %506 = vmatprep.subr.mxu0 0.0
  %507 = vmatpush1.msra.mxu0 0.0
  %508 = vmatprep.subr.mxu0 0.0
  %509 = vmatpush1.msra.mxu0 0.0
  %510 = vmatprep.subr.mxu0 0.0
  %511 = vmatpush1.msra.mxu0 0.0
  %512 = vmatprep.subr.mxu0 0.0
  %513 = vmatpush1.msra.mxu0 0.0
  %514 = vmatprep.subr.mxu0 0.0
  %515 = vmatpush1.msra.mxu0 0.0
  %516 = vmatprep.subr.mxu0 0.0
  %517 = vmatpush1.msra.mxu0 0.0
  %518 = vmatprep.subr.mxu0 0.0
  %519 = vmatpush1.msra.mxu0 0.0
  %520 = vmatprep.subr.mxu0 0.0
  %521 = vmatpush1.msra.mxu0 0.0
  %522 = vmatprep.subr.mxu0 0.0
  %523 = vmatpush1.msra.mxu0 0.0
  %524 = vmatprep.subr.mxu0 0.0
  %525 = vmatpush1.msra.mxu0 0.0
  %526 = vmatprep.subr.mxu0 0.0
  %527 = vmatpush1.msra.mxu0 0.0
  %528 = vmatprep.subr.mxu0 0.0
  %529 = vmatpush1.msra.mxu0 0.0
  %530 = vmatprep.subr.mxu0 0.0
  %531 = vmatpush1.msra.mxu0 0.0
  %532 = vmatprep.subr.mxu0 0.0
  %533 = vmatpush1.msra.mxu0 0.0
  %534 = vmatprep.subr.mxu0 0.0
  %535 = vmatpush1.msra.mxu0 0.0
  %536 = vmatprep.subr.mxu0 0.0
  %537 = vmatpush1.msra.mxu0 0.0
  %538 = vmatprep.subr.mxu0 0.0
  %539 = vmatpush1.msra.mxu0 0.0
  %540 = vmatprep.subr.mxu0 0.0
  %541 = vmatpush1.msra.mxu0 0.0
  %542 = vmatprep.subr.mxu0 0.0
  %543 = vmatpush1.msra.mxu0 0.0
  %544 = vmatprep.subr.mxu0 0.0
  %545 = vmatpush1.msra.mxu0 0.0
  %546 = vmatprep.subr.mxu0 0.0
  %547 = vmatpush1.msra.mxu0 0.0
  %548 = vmatprep.subr.mxu0 0.0
  %549 = vmatpush1.msra.mxu0 0.0
  %550 = vmatprep.mubr.f32.mxu0 0.0
  %551 = vmatmul.mubr.f32.gmra.mrb[0].mxu0 %v61
  %v552 = vpop.f32.mrb[0].mxu0
  %v553 = vadd.f32 0.0, %v552
  %v554 = vpop.f32.mrb[0].mxu0
  %555 = vmatprep.mubr.f32.mxu0 0.0
  %556 = vmatmul.mubr.f32.gmra.mrb[0].mxu0 %v64
  %v557 = vpop.f32.mrb[0].mxu0
  %v558 = vadd.f32 0.0, %v557
  %v559 = vpop.f32.mrb[0].mxu0
  %560 = vdwg.mxu0
  %561 = vst.msk [vmem:[#allocation6] sm:$0xff] %vm466, %v246
  %562 = vst.msk [vmem:[#allocation6 + $0x8] sm:$0xff] %vm466, %v247
  %565 = vrot.lane.b32.xlu0 %v553, 32
  %v566 = vpop.permute.xlu0 %565
  %567 = vrot.lane.b32.xlu0 %v558, 32
  %v568 = vpop.permute.xlu0 %567
  %vm571 = vcmask 785664
  %572 = vst.msk [vmem:[#allocation6] sm:$0xff] %vm571, %v566
  %573 = vst.msk [vmem:[#allocation6 + $0x8] sm:$0xff] %vm571, %v568
  %v574 = vld [vmem:[#allocation6] sm:$0xff]
  %v575 = vld [vmem:[#allocation6 + $0x8] sm:$0xff]
  %v576 = vld [vmem:[%s6] sm:$0xff]
  %v577 = vld [vmem:[%s6 + $0x8] sm:$0xff]
  %v578 = vld [vmem:[%s6 + $0x10] sm:$0xff]
  %v579 = vld [vmem:[%s6 + $0x18] sm:$0xff]
  %v580 = vld [vmem:[%s6 + $0x20] sm:$0xff]
  %v581 = vld [vmem:[%s6 + $0x28] sm:$0xff]
  %v582 = vld [vmem:[%s6 + $0x30] sm:$0xff]
  %v583 = vld [vmem:[%s6 + $0x38] sm:$0xff]
  %v584 = vld [vmem:[%s6 + $0x40] sm:$0xff]
  %v585 = vld [vmem:[%s6 + $0x48] sm:$0xff]
  %v586 = vld [vmem:[%s6 + $0x50] sm:$0xff]
  %v587 = vld [vmem:[%s6 + $0x58] sm:$0xff]
  %v588 = vld [vmem:[%s6 + $0x60] sm:$0x1]
  %v589 = vlaneseq
  %v590 = vshrl.u32 %v589, 7
  %v591 = vsub.s32 0, %v590
  %v592 = vrot.slane %v588, %v591
  %vm593 = vcmask 785408
  %v595 = vsel %vm593, %v574, 0
  %v598 = vsel %vm593, %v575, 0
  %600 = vmatprep.subr.mxu0 0.0
  %601 = vmatpush1.msra.mxu0 %v576
  %602 = vmatprep.subr.mxu0 0.0
  %603 = vmatpush1.msra.mxu0 %v577
  %604 = vmatprep.subr.mxu0 0.0
  %605 = vmatpush1.msra.mxu0 %v578
  %606 = vmatprep.subr.mxu0 0.0
  %607 = vmatpush1.msra.mxu0 %v579
  %608 = vmatprep.subr.mxu0 0.0
  %609 = vmatpush1.msra.mxu0 %v580
  %610 = vmatprep.subr.mxu0 0.0
  %611 = vmatpush1.msra.mxu0 %v581
  %612 = vmatprep.subr.mxu0 0.0
  %613 = vmatpush1.msra.mxu0 %v582
  %614 = vmatprep.subr.mxu0 0.0
  %615 = vmatpush1.msra.mxu0 %v583
  %616 = vmatprep.subr.mxu0 0.0
  %617 = vmatpush1.msra.mxu0 %v584
  %618 = vmatprep.subr.mxu0 0.0
  %619 = vmatpush1.msra.mxu0 %v585
  %620 = vmatprep.subr.mxu0 0.0
  %621 = vmatpush1.msra.mxu0 %v586
  %622 = vmatprep.subr.mxu0 0.0
  %623 = vmatpush1.msra.mxu0 %v587
  %624 = vmatprep.subr.mxu0 0.0
  %625 = vmatpush1.msra.mxu0 0.0
  %626 = vmatprep.subr.mxu0 0.0
  %627 = vmatpush1.msra.mxu0 0.0
  %628 = vmatprep.subr.mxu0 0.0
  %629 = vmatpush1.msra.mxu0 0.0
  %630 = vmatprep.subr.mxu0 0.0
  %631 = vmatpush1.msra.mxu0 0.0
  %632 = vmatprep.subr.mxu0 0.0
  %633 = vmatpush1.msra.mxu0 0.0
  %634 = vmatprep.subr.mxu0 0.0
  %635 = vmatpush1.msra.mxu0 0.0
  %636 = vmatprep.subr.mxu0 0.0
  %637 = vmatpush1.msra.mxu0 0.0
  %638 = vmatprep.subr.mxu0 0.0
  %639 = vmatpush1.msra.mxu0 0.0
  %640 = vmatprep.subr.mxu0 0.0
  %641 = vmatpush1.msra.mxu0 0.0
  %642 = vmatprep.subr.mxu0 0.0
  %643 = vmatpush1.msra.mxu0 0.0
  %644 = vmatprep.subr.mxu0 0.0
  %645 = vmatpush1.msra.mxu0 0.0
  %646 = vmatprep.subr.mxu0 0.0
  %647 = vmatpush1.msra.mxu0 0.0
  %648 = vmatprep.subr.mxu0 0.0
  %649 = vmatpush1.msra.mxu0 0.0
  %650 = vmatprep.subr.mxu0 0.0
  %651 = vmatpush1.msra.mxu0 0.0
  %652 = vmatprep.subr.mxu0 0.0
  %653 = vmatpush1.msra.mxu0 0.0
  %654 = vmatprep.subr.mxu0 0.0
  %655 = vmatpush1.msra.mxu0 0.0
  %656 = vmatprep.subr.mxu0 0.0
  %657 = vmatpush1.msra.mxu0 0.0
  %658 = vmatprep.subr.mxu0 0.0
  %659 = vmatpush1.msra.mxu0 0.0
  %660 = vmatprep.subr.mxu0 0.0
  %661 = vmatpush1.msra.mxu0 0.0
  %662 = vmatprep.subr.mxu0 0.0
  %663 = vmatpush1.msra.mxu0 0.0
  %664 = vmatprep.mubr.f32.mxu0 0.0
  %665 = vmatmul.mubr.f32.gmra.mrb[0].mxu0 %v595
  %v666 = vpop.f32.mrb[0].mxu0
  %v667 = vadd.f32 %v592, %v666
  %v668 = vpop.f32.mrb[0].mxu0
  %669 = vmatprep.mubr.f32.mxu0 0.0
  %670 = vmatmul.mubr.f32.gmra.mrb[0].mxu0 %v598
  %v671 = vpop.f32.mrb[0].mxu0
  %v672 = vadd.f32 %v592, %v671
  %v673 = vpop.f32.mrb[0].mxu0
  %674 = vdwg.mxu0
  %vm675 = vcmask 39936
  %676 = vst.msk [vmem:[%s7] sm:$0xff] %vm675, %v667
  %677 = vst.msk [vmem:[%s7 + $0x8] sm:$0xff] %vm675, %v672
  // Predicated region
  $region30: #{hetero_graphsage_forward.1} parent=0 // pred_check
    _
  $region31: #{hetero_graphsage_forward.1} parent=0 // pred_check_branch
    %679 = sbr.rel (0) target = $region33
  $region32: #{hetero_graphsage_forward.1} parent=0 // pred_region
    _
  $region33: #{hetero_graphsage_forward.1} parent=0 // pred_fallthru
    _
  // Predicated region
  $region34: #{hetero_graphsage_forward.1} parent=0 // pred_check
    _
  $region35: #{hetero_graphsage_forward.1} parent=0 // pred_check_branch
    %681 = sbr.rel (0) target = $region37
  $region36: #{hetero_graphsage_forward.1} parent=0 // pred_region
    _
  $region37: #{hetero_graphsage_forward.1} parent=0 // pred_fallthru
    _

</llo_original>
